<compile_context>
chip_gen: v6e
topology: v6e:2x2x1
jax: 0.10.0
libtpu: 0.0.40
codegen_flags: <defaults>
</compile_context>

<pallas_src>
import jax
import jax.numpy as jnp
from jax.experimental import pallas as pl
from jax.experimental.pallas import tpu as pltpu


# ------------------------------ Pallas kernel -------------------------------

def _flat_sim_kernel(x_ref, y_ref, m_ref, w_ref, b_ref, o_ref):
    """Fused FlatSimV2 scores for one (bB, tL) tile.

    x_ref: (bB, tL, H)  sequence states (native dtype; upcast in-kernel)
    y_ref: (bB, H)      per-batch comparison vector (native dtype)
    m_ref: (bB, tL)     int32, nonzero -> position is masked (padding)
    w_ref: (4, H)       Linear(4H, 1) weight split into rows [w_x, w_y, w_xy, w_abs]
    b_ref: (1,)         Linear bias, SMEM scalar
    o_ref: (bB, tL)     output scores, float32 (lane-dense)
    """
    y = y_ref[...].astype(jnp.float32)                       # (bB, H)
    wx, wy = w_ref[0:1, :], w_ref[1:2, :]                    # (1, H)
    wxy, wab = w_ref[2:3, :], w_ref[3:4, :]                  # (1, H)

    # L-invariant, per-batch pieces (hoisted out of the big x expression):
    #   cat([x, y, x*y, |x-y|]) @ W.T  ==  x.(wx + y*wxy) + |x-y|.wab + (y.wy + b)
    w_eff = wx + y * wxy                                      # (bB, H)
    const = jnp.sum(y * wy, axis=-1, keepdims=True) + b_ref[0]  # (bB, 1)

    x = x_ref[...].astype(jnp.float32)                        # (bB, tL, H) in f32
    z = x * w_eff[:, None, :] + jnp.abs(x - y[:, None, :]) * wab[:, None, :]
    s = jnp.sum(z, axis=-1) + const                           # (bB, tL)

    # scores.masked_fill_(x_mask, -inf) -- one unmasked, lane-dense tile store.
    o_ref[...] = jnp.where(m_ref[...] != 0, jnp.float32(-jnp.inf), s)


# ------------------------------ tiling helpers ------------------------------

def _largest_divisor_multiple(total, base, limit):
    """Largest multiple of `base` that divides `total` and is <= limit (0 if none)."""
    best = 0
    k = base
    limit = min(total, limit)
    while k <= limit:
        if total % k == 0:
            best = k
        k += base
    return best


def _pick_tiles(B, L, H, itemsize, target_tile_bytes):
    """Pick (bB, tL) so the x1 tile is ~target_tile_bytes and TPU-tileable.

    For the lane-dense 2-D (B, L) output / mask blocks:
      * tL must be a multiple of 128 or equal to L,
      * bB must be a multiple of 8 or equal to B.
    Fallbacks always pick the full dim (correct, just a bigger tile).
    """
    rows_budget = max(8, target_tile_bytes // max(1, H * itemsize))
    if L <= rows_budget:
        tL = L
    else:
        tL = _largest_divisor_multiple(L, 128, rows_budget) or L
    want_b = max(1, rows_budget // tL)
    if B <= want_b:
        bB = B
    else:
        bB = _largest_divisor_multiple(B, 8, max(want_b, 8)) or B
    return bB, tL


# --------------------------------- wrapper ----------------------------------

def flat_similarity_wrapper(x1, x2, x_mask, weight, bias,
                            *, target_tile_bytes=8 * 1024 * 1024):
    """FlatSimilarityWrapper.forward (score_func = FlatSimV2).

    x1:     (B, L, H) float32 / bfloat16 (streamed in native dtype)
    x2:     (B, H)    float32 / bfloat16
    x_mask: (B, L)    bool / int  (True -> fill with -inf)
    weight: (4*H,)    flattened PyTorch Linear(4H, 1) weight row
    bias:   (1,)      Linear bias
    returns (B, L) float32 scores
    """
    B, L, H = x1.shape
    itemsize = jnp.dtype(x1.dtype).itemsize
    bB, tL = _pick_tiles(B, L, H, itemsize, target_tile_bytes)
    grid = (B // bB, L // tL)

    m2 = x_mask.astype(jnp.int32)                   # tiny (B, L) array
    w2 = weight.astype(jnp.float32).reshape(4, H)   # rows: [w_x, w_y, w_xy, w_abs]
    b1 = bias.astype(jnp.float32).reshape(1)

    cost = pl.CostEstimate(
        flops=7 * B * L * H,
        transcendentals=0,
        bytes_accessed=(x1.size * itemsize
                        + x2.size * jnp.dtype(x2.dtype).itemsize
                        + B * L * 4            # int32 mask
                        + 4 * H * 4 + 4        # weights + bias
                        + B * L * 4),          # f32 output
    )

    out = pl.pallas_call(
        _flat_sim_kernel,
        out_shape=jax.ShapeDtypeStruct((B, L), jnp.float32),
        grid=grid,
        in_specs=[
            pl.BlockSpec((bB, tL, H), lambda i, j: (i, j, 0)),   # x1 slab
            pl.BlockSpec((bB, H), lambda i, j: (i, 0)),          # x2 per batch-tile
            pl.BlockSpec((bB, tL), lambda i, j: (i, j)),         # mask (lane-dense)
            pl.BlockSpec((4, H), lambda i, j: (0, 0)),           # split weight rows
            pl.BlockSpec(memory_space=pltpu.MemorySpace.SMEM),   # bias scalar
        ],
        out_specs=pl.BlockSpec((bB, tL), lambda i, j: (i, j)),   # lane-dense scores
        compiler_params=pltpu.CompilerParams(
            dimension_semantics=("parallel", "parallel")),
        cost_estimate=cost,
    )(x1, x2, m2, w2, b1)
    return out


# ------------------------- pure-JAX reference (spec) -------------------------

def reference_forward(x1, x2, x_mask, weight, bias):
    """Mirror of the PyTorch FlatSimV2 forward (with the explicit concat)."""
    B, L, H = x1.shape
    y = jnp.broadcast_to(x2[:, None, :], (B, L, H))
    flat_x = jnp.concatenate([x1, y, x1 * y, jnp.abs(x1 - y)], axis=2)
    flat_x = flat_x.reshape(B * L, 4 * H)
    scores = jnp.dot(flat_x, weight.reshape(4 * H, 1),
                     precision=jax.lax.Precision.HIGHEST) + bias
    scores = scores.reshape(B, L)
    return jnp.where(x_mask, -jnp.inf, scores)


# ----------------------------------- main ------------------------------------

if __name__ == "__main__":
    key = jax.random.PRNGKey(0)
    kx, ky, kw = jax.random.split(key, 3)

    # ---- small shapes implied by the module: batch=2, seq=8, hidden=32 ----
    B, L, H = 2, 8, 32
    x1 = jax.random.normal(kx, (B, L, H), jnp.float32)
    x2 = jax.random.normal(ky, (B, H), jnp.float32)
    weight = (0.05 * jax.random.normal(kw, (4 * H,))).astype(jnp.float32)
    bias = jnp.array([0.01], jnp.float32)
    x_mask = jnp.array([[False] * 8,
                        [False] * 6 + [True] * 2])   # True = padding -> -inf

    # NOTE: DropoutWrapper is identity here (inference / dropout_p defaults to 0).
    scores = jax.block_until_ready(
        flat_similarity_wrapper(x1, x2, x_mask, weight, bias))
    ref = reference_forward(x1, x2, x_mask, weight, bias)
    assert scores.shape == (B, L)
    assert bool(jnp.all(jnp.isneginf(scores[x_mask])))
    assert bool(jnp.all(jnp.isfinite(scores[~x_mask])))
    assert bool(jnp.allclose(scores, ref, rtol=1e-5, atol=1e-5))

    # ---- bf16 streaming path: x1/x2 stay bf16 in HBM, upcast happens in-kernel ----
    s_bf = jax.block_until_ready(
        flat_similarity_wrapper(x1.astype(jnp.bfloat16), x2.astype(jnp.bfloat16),
                                x_mask, weight, bias))
    ref_bf = reference_forward(x1.astype(jnp.bfloat16).astype(jnp.float32),
                               x2.astype(jnp.bfloat16).astype(jnp.float32),
                               x_mask, weight, bias)
    assert bool(jnp.allclose(s_bf, ref_bf, rtol=1e-4, atol=1e-4))

    # ---- larger shapes exercising the tiled (batch_tiles, L_tiles) grid ----
    B2, L2, H2 = 16, 512, 128
    kx2, ky2, kw2, km2 = jax.random.split(jax.random.PRNGKey(1), 4)
    x1b = jax.random.normal(kx2, (B2, L2, H2), jnp.float32)
    x2b = jax.random.normal(ky2, (B2, H2), jnp.float32)
    wb = (0.05 * jax.random.normal(kw2, (4 * H2,))).astype(jnp.float32)
    bb = jnp.array([-0.02], jnp.float32)
    maskb = jax.random.bernoulli(km2, 0.25, (B2, L2))
    sb = jax.block_until_ready(
        flat_similarity_wrapper(x1b, x2b, maskb, wb, bb,
                                target_tile_bytes=256 * H2 * 4))  # force a 2x2 grid
    refb = reference_forward(x1b, x2b, maskb, wb, bb)
    assert bool(jnp.allclose(sb, refb, rtol=1e-4, atol=1e-4))

    print("KERNEL_OK")
</pallas_src>

<mosaic_0001>
module attributes {stable_mosaic.version = 11 : i64} {
  func.func @_flat_sim_kernel(%arg0: i32, %arg1: i32, %arg2: memref<2x8x32xf32, #tpu.memory_space<vmem>>, %arg3: memref<2x32xf32, #tpu.memory_space<vmem>>, %arg4: memref<2x8xi32, #tpu.memory_space<vmem>>, %arg5: memref<4x32xf32, #tpu.memory_space<vmem>>, %arg6: memref<1xf32, #tpu.memory_space<smem>>, %arg7: memref<2x8xf32, #tpu.memory_space<vmem>>) attributes {dimension_semantics = [#tpu.dimension_semantics<parallel>, #tpu.dimension_semantics<parallel>], iteration_bounds = array<i64: 1, 1>, scalar_prefetch = 0 : i64, scratch_operands = 0 : i64, tpu.core_type = #tpu.core_type<tc>, window_params = [{transform_indices = @transform_0, window_bounds = array<i64: 2, 8, 32>}, {transform_indices = @transform_1, window_bounds = array<i64: 2, 32>}, {transform_indices = @transform_2, window_bounds = array<i64: 2, 8>}, {pipeline_mode = #tpu.pipeline_mode<synchronous>, transform_indices = @transform_3, window_bounds = array<i64: 4, 32>}, {transform_indices = @transform_4, window_bounds = array<i64: 1>}, {transform_indices = @transform_5, window_bounds = array<i64: 2, 8>}]} {
    %c0 = arith.constant 0 : index
    %c0_0 = arith.constant 0 : index
    %0 = vector.load %arg3[%c0, %c0_0] : memref<2x32xf32, #tpu.memory_space<vmem>>, vector<2x32xf32>
    %c0_1 = arith.constant 0 : index
    %c0_2 = arith.constant 0 : index
    %1 = vector.load %arg5[%c0_1, %c0_2] : memref<4x32xf32, #tpu.memory_space<vmem>>, vector<1x32xf32>
    %c1 = arith.constant 1 : index
    %c0_3 = arith.constant 0 : index
    %2 = vector.load %arg5[%c1, %c0_3] : memref<4x32xf32, #tpu.memory_space<vmem>>, vector<1x32xf32>
    %c2 = arith.constant 2 : index
    %c0_4 = arith.constant 0 : index
    %3 = vector.load %arg5[%c2, %c0_4] : memref<4x32xf32, #tpu.memory_space<vmem>>, vector<1x32xf32>
    %c3 = arith.constant 3 : index
    %c0_5 = arith.constant 0 : index
    %4 = vector.load %arg5[%c3, %c0_5] : memref<4x32xf32, #tpu.memory_space<vmem>>, vector<1x32xf32>
    %5 = vector.broadcast %3 : vector<1x32xf32> to vector<2x32xf32>
    %6 = arith.mulf %0, %5 : vector<2x32xf32>
    %7 = vector.broadcast %1 : vector<1x32xf32> to vector<2x32xf32>
    %8 = arith.addf %7, %6 : vector<2x32xf32>
    %9 = vector.broadcast %2 : vector<1x32xf32> to vector<2x32xf32>
    %10 = arith.mulf %0, %9 : vector<2x32xf32>
    %cst = arith.constant dense<0.000000e+00> : vector<2xf32>
    %11 = vector.multi_reduction <add>, %10, %cst [1] : vector<2x32xf32> to vector<2xf32>
    %12 = vector.shape_cast %11 : vector<2xf32> to vector<2x1xf32>
    %c0_6 = arith.constant 0 : index
    %13 = memref.load %arg6[%c0_6] : memref<1xf32, #tpu.memory_space<smem>>
    %14 = vector.broadcast %13 : f32 to vector<2x1xf32>
    %15 = arith.addf %12, %14 : vector<2x1xf32>
    %c0_7 = arith.constant 0 : index
    %c0_8 = arith.constant 0 : index
    %c0_9 = arith.constant 0 : index
    %16 = vector.load %arg2[%c0_7, %c0_8, %c0_9] : memref<2x8x32xf32, #tpu.memory_space<vmem>>, vector<2x8x32xf32>
    %17 = vector.shape_cast %8 : vector<2x32xf32> to vector<2x1x32xf32>
    %18 = vector.broadcast %17 : vector<2x1x32xf32> to vector<2x8x32xf32>
    %19 = arith.mulf %16, %18 : vector<2x8x32xf32>
    %20 = vector.shape_cast %0 : vector<2x32xf32> to vector<2x1x32xf32>
    %21 = vector.broadcast %20 : vector<2x1x32xf32> to vector<2x8x32xf32>
    %22 = arith.subf %16, %21 : vector<2x8x32xf32>
    %23 = math.absf %22 : vector<2x8x32xf32>
    %24 = vector.shape_cast %4 : vector<1x32xf32> to vector<1x1x32xf32>
    %25 = vector.broadcast %24 : vector<1x1x32xf32> to vector<2x8x32xf32>
    %26 = arith.mulf %23, %25 : vector<2x8x32xf32>
    %27 = arith.addf %19, %26 : vector<2x8x32xf32>
    %cst_10 = arith.constant dense<0.000000e+00> : vector<2x8xf32>
    %28 = vector.multi_reduction <add>, %27, %cst_10 [2] : vector<2x8x32xf32> to vector<2x8xf32>
    %29 = vector.broadcast %15 : vector<2x1xf32> to vector<2x8xf32>
    %30 = arith.addf %28, %29 : vector<2x8xf32>
    %c0_11 = arith.constant 0 : index
    %c0_12 = arith.constant 0 : index
    %31 = vector.load %arg4[%c0_11, %c0_12] : memref<2x8xi32, #tpu.memory_space<vmem>>, vector<2x8xi32>
    %c0_i32 = arith.constant 0 : i32
    %32 = vector.broadcast %c0_i32 : i32 to vector<2x8xi32>
    %33 = arith.cmpi ne, %31, %32 : vector<2x8xi32>
    %cst_13 = arith.constant 0xFF800000 : f32
    %34 = vector.broadcast %cst_13 : f32 to vector<2x8xf32>
    %35 = arith.select %33, %34, %30 : vector<2x8xi1>, vector<2x8xf32>
    %c0_14 = arith.constant 0 : index
    %c0_15 = arith.constant 0 : index
    %36 = vector.load %arg7[%c0_14, %c0_15] : memref<2x8xf32, #tpu.memory_space<vmem>>, vector<2x8xf32>
    tpu.vector_store %arg7[%c0_14, %c0_15], %35 {strides = array<i32>} : memref<2x8xf32, #tpu.memory_space<vmem>>, vector<2x8xf32>,
    return
  }
  func.func @transform_0(%arg0: i32, %arg1: i32) -> (i32, i32, i32) {
    %c0_i32 = arith.constant 0 : i32
    %c0_i32_0 = arith.constant 0 : i32
    return %arg0, %arg1, %c0_i32 : i32, i32, i32
  }
  func.func @transform_1(%arg0: i32, %arg1: i32) -> (i32, i32) {
    %c0_i32 = arith.constant 0 : i32
    %c0_i32_0 = arith.constant 0 : i32
    return %arg0, %c0_i32 : i32, i32
  }
  func.func @transform_2(%arg0: i32, %arg1: i32) -> (i32, i32) {
    %c0_i32 = arith.constant 0 : i32
    return %arg0, %arg1 : i32, i32
  }
  func.func @transform_3(%arg0: i32, %arg1: i32) -> (i32, i32) {
    %c0_i32 = arith.constant 0 : i32
    %c0_i32_0 = arith.constant 0 : i32
    %c0_i32_1 = arith.constant 0 : i32
    return %c0_i32, %c0_i32_0 : i32, i32
  }
  func.func @transform_4(%arg0: i32, %arg1: i32) -> i32 {
    %c0_i32 = arith.constant 0 : i32
    %c0_i32_0 = arith.constant 0 : i32
    return %c0_i32 : i32
  }
  func.func @transform_5(%arg0: i32, %arg1: i32) -> (i32, i32) {
    %c0_i32 = arith.constant 0 : i32
    return %arg0, %arg1 : i32, i32
  }
}

</mosaic_0001>

<llo_original>
// kernel: tpu_custom_call.1
$region0: #{tpu_custom_call.1}
  #allocation0 [shape = 'u32[]', space=smem, size = 0x4, offset = 0x4, fixed_abs, tag = 'smem constant byte address 0x4 - core index']
  #allocation1 [shape = 'u32[144,128]{1,0:T(1,128)}', space=vmem, size = 0x12000, scoped, tag = 'internal scratch']
  #allocation2 [shape = 'f32[1]{0:T(128)S(6)}', space=smem, size = 0x200, scoped, tag = 'scoped memory for tpu_custom_call.1']
  %s0 = inlined_call_operand.hbm [shape: f32[2,8,32], index: 0, kind: input, shape index: {}]
  %s1 = inlined_call_operand.vmem [shape: f32[2,32], index: 1, kind: input, shape index: {}]
  %s2 = inlined_call_operand.hbm [shape: s32[2,8], index: 2, kind: input, shape index: {}]
  %s3 = inlined_call_operand.vmem [shape: f32[4,32], index: 3, kind: input, shape index: {}]
  %s4 = inlined_call_operand.<no memory space> [shape: f32[1], index: 4, kind: input, shape index: {}]
  %s5 = inlined_call_operand.hbm [shape: f32[2,8], index: 5, kind: output, shape index: {}]
  %s6 = sld [smem:[#allocation0]]
  $region38: #{tpu_custom_call.1} parent=0
    _
  %s8 = ssub.s32 1, %s6
  %s9 = scalar_select 0, %s8, %s6
  %10 = sst [smem:[#allocation2]] %s4
  $region1: #{tpu_custom_call.1} parent=0
    #allocation3 [shape = 'u8[8192]{0}', space=vmem, size = 0x2000, scoped, tag = 'input window, operand 0, single buffered']
    #allocation4 [shape = 's32[1]{0}', space=sflag, size = 0x4, scoped, tag = 'scoped memory for tpu_custom_call.1']
    #allocation5 [shape = 's32[1]{0}', space=sflag, size = 0x4, scoped, tag = 'scoped memory for tpu_custom_call.1']
    #allocation6 [shape = 'u8[1024]{0}', space=vmem, size = 0x400, scoped, tag = 'input window, operand 2, single buffered']
    #allocation7 [shape = 's32[1]{0}', space=sflag, size = 0x4, scoped, tag = 'scoped memory for tpu_custom_call.1']
    #allocation8 [shape = 'u8[1024]{0}', space=vmem, size = 0x400, scoped, tag = 'output window, operand 0, single buffered']
    %11 = vsyncpa [#allocation4], 0
    %12 = vsyncpa [#allocation7], 0
    %13 = vsyncpa [#allocation5], 0
    // Predicated region
    $region2: #{tpu_custom_call.1} parent=1 // pred_check
      _
    $region3: #{tpu_custom_call.1} parent=1 // pred_check_branch
      %15 = sbr.rel (0) target = $region5
    $region4: #{tpu_custom_call.1} parent=1 // pred_region
      %s17 = ssub.s32 256, 256
      %18 = vsyncadd [#allocation4], %s17
      %s19 = sshll.u32 [#allocation3], 4
      %s20 = int_to_ptr.vmem [resolvable:$true] %s19
      %25 = dma.hbm_to_vmem [thread:$0]  %s0, 256, %s20, [#allocation4], 128, 128, 8
    $region5: #{tpu_custom_call.1} parent=1 // pred_fallthru
      _
    // Predicated region
    $region6: #{tpu_custom_call.1} parent=1 // pred_check
      _
    $region7: #{tpu_custom_call.1} parent=1 // pred_check_branch
      %27 = sbr.rel (0) target = $region9
    $region8: #{tpu_custom_call.1} parent=1 // pred_region
      _
    $region9: #{tpu_custom_call.1} parent=1 // pred_fallthru
      _
    // Predicated region
    $region10: #{tpu_custom_call.1} parent=1 // pred_check
      _
    $region11: #{tpu_custom_call.1} parent=1 // pred_check_branch
      %29 = sbr.rel (0) target = $region13
    $region12: #{tpu_custom_call.1} parent=1 // pred_region
      %s31 = ssub.s32 32, 32
      %32 = vsyncadd [#allocation7], %s31
      %s34 = sshll.u32 [#allocation6], 4
      %s35 = int_to_ptr.vmem [resolvable:$true] %s34
      %37 = dma.hbm_to_vmem [thread:$0]  %s2, 32, %s35, [#allocation7]
    $region13: #{tpu_custom_call.1} parent=1 // pred_fallthru
      _
    // Predicated region
    $region14: #{tpu_custom_call.1} parent=1 // pred_check
      _
    $region15: #{tpu_custom_call.1} parent=1 // pred_check_branch
      %39 = sbr.rel (0) target = $region17
    $region16: #{tpu_custom_call.1} parent=1 // pred_region
      _
    $region17: #{tpu_custom_call.1} parent=1 // pred_fallthru
      _
    // Predicated region
    $region18: #{tpu_custom_call.1} parent=1 // pred_check
      _
    $region19: #{tpu_custom_call.1} parent=1 // pred_check_branch
      %41 = sbr.rel (0) target = $region21
    $region20: #{tpu_custom_call.1} parent=1 // pred_region
      _
    $region21: #{tpu_custom_call.1} parent=1 // pred_fallthru
      _
    // Predicated region
    $region22: #{tpu_custom_call.1} parent=1 // pred_check
      _
    $region23: #{tpu_custom_call.1} parent=1 // pred_check_branch
      %43 = sbr.rel (0) target = $region25
    $region24: #{tpu_custom_call.1} parent=1 // pred_region
      %44 = dma.done [#allocation4], 256
    $region25: #{tpu_custom_call.1} parent=1 // pred_fallthru
      _
    // Predicated region
    $region26: #{tpu_custom_call.1} parent=1 // pred_check
      _
    $region27: #{tpu_custom_call.1} parent=1 // pred_check_branch
      %46 = sbr.rel (0) target = $region29
    $region28: #{tpu_custom_call.1} parent=1 // pred_region
      %47 = dma.done [#allocation7], 32
    $region29: #{tpu_custom_call.1} parent=1 // pred_fallthru
      _
    %v48 = vld [vmem:[%s1] sm:$0x3]
    %v49 = vld [vmem:[%s3] sm:$0x1]
    %v50 = vld [vmem:[%s3 + $0x1] sm:$0x1]
    %v51 = vld [vmem:[%s3 + $0x2] sm:$0x1]
    %v52 = vld [vmem:[%s3 + $0x3] sm:$0x1]
    %v53 = vlaneseq
    %v54 = vshrl.u32 %v53, 7
    %v55 = vsub.s32 0, %v54
    %v56 = vrot.slane %v51, %v55
    %v57 = vmul.f32 %v48, %v56
    %v58 = vlaneseq
    %v59 = vshrl.u32 %v58, 7
    %v60 = vsub.s32 0, %v59
    %v61 = vrot.slane %v49, %v60
    %v62 = vadd.f32 %v61, %v57
    %v63 = vlaneseq
    %v64 = vshrl.u32 %v63, 7
    %v65 = vsub.s32 0, %v64
    %v66 = vrot.slane %v50, %v65
    %v67 = vmul.f32 %v48, %v66
    %vm68 = vcmask 254976
    %v69 = vsel %vm68, %v67, 0.0
    %70 = vadd.xlane.f32.xlu0 %v69
    %v71 = vpop.xlane.xlu0 %70
    %s72 = sld [smem:[#allocation2]]
    %v73 = vstv %s72
    %v74 = vadd.f32 %v71, %v73
    %v75 = vld [vmem:[#allocation3] sm:$0xff]
    %v76 = vld [vmem:[#allocation3 + $0x8] sm:$0xff]
    %v79 = vunpack.c.l.s4 1966171168
    %v80 = vunpack.c.0.s8 %v79
    %v81 = vlaneseq
    %v82 = vshrl.u32 %v81, 7
    %v83 = vsub.s32 %v80, %v82
    %v84 = vrot.slane %v62, %v83
    %v85 = vcombine.high %v84, %v84
    %v87 = vunpack.c.l.s4 1966171168
    %v88 = vunpack.c.0.s8 %v87
    %v89 = vlaneseq
    %v90 = vshrl.u32 %v89, 7
    %v91 = vsub.s32 %v88, %v90
    %v92 = vrot.slane %v84, %v91
    %v94 = vunpack.c.l.s4 1966171168
    %v95 = vunpack.c.0.s8 %v94
    %v96 = vlaneseq
    %v97 = vshrl.u32 %v96, 7
    %v98 = vsub.s32 %v95, %v97
    %v99 = vrot.slane %v85, %v98
    %v100 = vlaneseq
    %v101 = vshrl.u32 %v100, 7
    %v102 = vsub.s32 0, %v101
    %v103 = vrot.slane %v92, %v102
    %v104 = vlaneseq
    %v105 = vshrl.u32 %v104, 7
    %v106 = vsub.s32 0, %v105
    %v107 = vrot.slane %v99, %v106
    %v110 = vmul.f32 %v75, %v103
    %v111 = vmul.f32 %v76, %v107
    %v114 = vunpack.c.l.s4 1966171168
    %v115 = vunpack.c.0.s8 %v114
    %v116 = vlaneseq
    %v117 = vshrl.u32 %v116, 7
    %v118 = vsub.s32 %v115, %v117
    %v119 = vrot.slane %v48, %v118
    %v120 = vcombine.high %v119, %v119
    %v122 = vunpack.c.l.s4 1966171168
    %v123 = vunpack.c.0.s8 %v122
    %v124 = vlaneseq
    %v125 = vshrl.u32 %v124, 7
    %v126 = vsub.s32 %v123, %v125
    %v127 = vrot.slane %v119, %v126
    %v129 = vunpack.c.l.s4 1966171168
    %v130 = vunpack.c.0.s8 %v129
    %v131 = vlaneseq
    %v132 = vshrl.u32 %v131, 7
    %v133 = vsub.s32 %v130, %v132
    %v134 = vrot.slane %v120, %v133
    %v135 = vlaneseq
    %v136 = vshrl.u32 %v135, 7
    %v137 = vsub.s32 0, %v136
    %v138 = vrot.slane %v127, %v137
    %v139 = vlaneseq
    %v140 = vshrl.u32 %v139, 7
    %v141 = vsub.s32 0, %v140
    %v142 = vrot.slane %v134, %v141
    %v145 = vsub.f32 %v75, %v138
    %v146 = vsub.f32 %v76, %v142
    %v147 = vand.u32 2147483647, %v145
    %v148 = vand.u32 2147483647, %v146
    %v149 = vlaneseq
    %v150 = vshrl.u32 %v149, 7
    %v151 = vsub.s32 0, %v150
    %v152 = vrot.slane %v52, %v151
    %v153 = vmul.f32 %v147, %v152
    %v154 = vmul.f32 %v148, %v152
    %v155 = vadd.f32 %v110, %v153
    %v156 = vadd.f32 %v111, %v154
    %vm157 = vcmask 261120
    %v158 = vsel %vm157, %v155, 0.0
    %159 = vadd.xlane.f32.xlu0 %v158
    %v160 = vpop.xlane.xlu0 %159
    %v161 = vsel %vm157, %v156, 0.0
    %162 = vadd.xlane.f32.xlu0 %v161
    %v163 = vpop.xlane.xlu0 %162
    %v165 = vlaneseq
    %v166 = vshrl.u32 %v165, 7
    %v167 = vsub.s32 0, %v166
    %v168 = vrot.slane %v74, %v167
    %v169 = vlaneseq
    %v170 = vshrl.u32 %v169, 7
    %v171 = vsub.s32 1, %v170
    %v172 = vrot.slane %v74, %v171
    %v175 = vadd.f32 %v160, %v168
    %v176 = vadd.f32 %v163, %v172
    %v177 = vld [vmem:[#allocation6] sm:$0x3]
    %vm178 = vcmp.ne.s32.totalorder %v177, 0
    %181 = vset.pattern.permute.xlu0 0
    %182 = vperm.xlu0 %181, %v175
    %v183 = vpop.permute.xlu0 %182
    %184 = vset.pattern.permute.xlu0 0
    %185 = vperm.xlu0 %184, %v176
    %v186 = vpop.permute.xlu0 %185
    %v187 = vlaneseq
    %v188 = vand.u32 %v187, 127
    %v189 = vlaneseq
    %v190 = vshrl.u32 %v189, 7
    %v191 = vsub.s32 %v188, %v190
    %v192 = vrot.slane %v183, %v191
    %v193 = vlaneseq
    %v194 = vshrl.u32 %v193, 7
    %v195 = vsub.s32 %v188, %v194
    %v196 = vrot.slane %v186, %v195
    %vm197 = vcmask 1041409
    %v198 = vsel %vm197, %v196, %v192
    %v200 = vsel %vm178, -inf, %v198
    %vm201 = vcmask 58368
    %202 = vst.msk [vmem:[#allocation8] sm:$0x3] %vm201, %v200
    // Predicated region
    $region30: #{tpu_custom_call.1} parent=1 // pred_check
      _
    $region31: #{tpu_custom_call.1} parent=1 // pred_check_branch
      %204 = sbr.rel (0) target = $region33
    $region32: #{tpu_custom_call.1} parent=1 // pred_region
      %s206 = ssub.s32 32, 32
      %207 = vsyncadd [#allocation5], %s206
      %s209 = sshll.u32 [#allocation8], 4
      %s210 = int_to_ptr.vmem [resolvable:$true] %s209
      %212 = dma.vmem_to_hbm [thread:$0]  %s210, 32, %s5, [#allocation5]
    $region33: #{tpu_custom_call.1} parent=1 // pred_fallthru
      _
    // Predicated region
    $region34: #{tpu_custom_call.1} parent=1 // pred_check
      _
    $region35: #{tpu_custom_call.1} parent=1 // pred_check_branch
      %214 = sbr.rel (0) target = $region37
    $region36: #{tpu_custom_call.1} parent=1 // pred_region
      %215 = dma.done [#allocation5], 32
    $region37: #{tpu_custom_call.1} parent=1 // pred_fallthru
      _
    %216 = vsyncpa [#allocation4], 1
    %217 = vsyncpa [#allocation7], 1
    %218 = vsyncpa [#allocation5], 1

</llo_original>
